<compile_context>
chip_gen: v7x
topology: tpu7x:2x2x1
jax: 0.10.0
libtpu: 0.0.40
codegen_flags: <defaults>
</compile_context>

<pallas_src>
import functools

import jax
import jax.numpy as jnp
from jax.experimental import pallas as pl
from jax.experimental.pallas import tpu as pltpu


def _ln_withbias_kernel(x_ref, w_ref, b_ref, o_ref, *, eps: float, inv_c: float):
    x = x_ref[...].astype(jnp.float32)             # (1, C, T)
    w = w_ref[...].astype(jnp.float32)             # (C, 1) -> broadcasts over lanes
    b = b_ref[...].astype(jnp.float32)             # (C, 1)
    # Single pass over x for both statistics (no centered full-tile temp).
    s1 = jnp.sum(x, axis=1, keepdims=True)         # (1, 1, T) cross-sublane reduce
    s2 = jnp.sum(x * x, axis=1, keepdims=True)     # (1, 1, T)
    mu = s1 * inv_c
    var = jnp.maximum(s2 * inv_c - mu * mu, 0.0)   # guard tiny negative from cancellation
    inv = jax.lax.rsqrt(var + eps)                 # EUP
    y = (x - mu) * inv * w + b
    o_ref[...] = y.astype(o_ref.dtype)


def _ln_biasfree_kernel(x_ref, w_ref, o_ref, *, eps: float, inv_c: float):
    x = x_ref[...].astype(jnp.float32)             # (1, C, T)
    w = w_ref[...].astype(jnp.float32)             # (C, 1)
    s1 = jnp.sum(x, axis=1, keepdims=True)
    s2 = jnp.sum(x * x, axis=1, keepdims=True)
    mu = s1 * inv_c
    # BiasFree_LayerNorm: variance is mean-centered (torch.var, unbiased=False)
    # but x itself is NOT mean-subtracted in the output -> no x-mu tile at all.
    var = jnp.maximum(s2 * inv_c - mu * mu, 0.0)
    inv = jax.lax.rsqrt(var + eps)
    y = x * inv * w
    o_ref[...] = y.astype(o_ref.dtype)


def _tile_and_vmem(hw: int, c: int, dtype_bytes: int, batch: int,
                   *, vmem_budget_bytes: int = 12 << 20,
                   min_grid_steps: int = 4) -> tuple[int, int]:
    """Pick the lane-axis tile (multiple of 128) and a scoped-VMEM limit.

    Working-set model per lane column of the tile:
      - x tile + out tile, each double-buffered by the pipeline: 4 * dtype_bytes * C
      - ~3 full-tile f32 intermediates from the f32 upcast / elementwise chain.
    The tile is capped so at least `min_grid_steps` grid steps exist (lets the
    two "parallel" axes be sharded across v7x's 2 TensorCores) whenever the
    problem is large enough to allow it.
    """
    hw_padded = pl.cdiv(hw, 128) * 128
    per_lane = max(1, c * (4 * dtype_bytes + 3 * 4))
    tile = (vmem_budget_bytes // per_lane) // 128 * 128
    tile = max(128, int(tile))
    tile = int(min(tile, hw_padded))

    # Keep enough grid steps for both v7x TensorCores (pure Python, static).
    while tile > 128 and batch * pl.cdiv(hw, tile) < min_grid_steps:
        tile = max(128, (tile // 2) // 128 * 128)

    working_set = tile * per_lane + 4 * c * 4      # + weight/bias (tiny)
    vmem_limit = max(32 << 20, int(working_set * 2))
    vmem_limit = min(vmem_limit, 48 << 20)         # stays under v7x's 64 MiB physical
    return tile, vmem_limit


def layer_norm_pallas(x, weight, bias=None, *, layer_norm_type: str = "WithBias",
                      eps: float = 1e-5):
    """Pallas equivalent of eamri.LayerNorm.forward.

    x:      (B, C, H, W)  -- NCHW, same as the PyTorch module
    weight: (C,)
    bias:   (C,)  (required for 'WithBias', ignored/None for 'BiasFree')
    returns (B, C, H, W)
    """
    bias_free = (layer_norm_type == "BiasFree")
    B, C, H, W = x.shape
    HW = H * W

    # Free reshapes only -- no transposes, no extra HBM traffic.
    x3 = x.reshape(B, C, HW)
    wcol = weight.reshape(C, 1)

    dtype_bytes = jnp.dtype(x.dtype).itemsize
    tile_hw, vmem_limit = _tile_and_vmem(HW, C, dtype_bytes, B)
    grid = (B, pl.cdiv(HW, tile_hw))

    x_spec = pl.BlockSpec((1, C, tile_hw), lambda b, j: (b, 0, j))
    par_spec = pl.BlockSpec((C, 1), lambda b, j: (0, 0))       # weight / bias (broadcast)
    out_spec = pl.BlockSpec((1, C, tile_hw), lambda b, j: (b, 0, j))

    inv_c = 1.0 / float(C)
    if bias_free:
        kernel = functools.partial(_ln_biasfree_kernel, eps=eps, inv_c=inv_c)
        in_specs = [x_spec, par_spec]
        args = (x3, wcol)
    else:
        if bias is None:
            raise ValueError("WithBias LayerNorm requires a bias parameter")
        kernel = functools.partial(_ln_withbias_kernel, eps=eps, inv_c=inv_c)
        in_specs = [x_spec, par_spec, par_spec]
        args = (x3, wcol, bias.reshape(C, 1))

    out3 = pl.pallas_call(
        kernel,
        out_shape=jax.ShapeDtypeStruct((B, C, HW), x.dtype),
        grid_spec=pltpu.PrefetchScalarGridSpec(
            num_scalar_prefetch=0,
            grid=grid,
            in_specs=in_specs,
            out_specs=out_spec,
        ),
        compiler_params=pltpu.CompilerParams(
            dimension_semantics=("parallel", "parallel"),
            vmem_limit_bytes=vmem_limit),
    )(*args)

    return out3.reshape(B, C, H, W)


def _reference_layer_norm(x, weight, bias, *, layer_norm_type, eps=1e-5):
    # Pure-JAX reference matching the PyTorch forward (to_3d -> LN over C -> to_4d).
    B, C, H, W = x.shape
    x3 = jnp.transpose(x, (0, 2, 3, 1)).reshape(B, H * W, C).astype(jnp.float32)
    mu = jnp.mean(x3, axis=-1, keepdims=True)
    var = jnp.mean((x3 - mu) ** 2, axis=-1, keepdims=True)
    if layer_norm_type == "BiasFree":
        y = x3 / jnp.sqrt(var + eps) * weight
    else:
        y = (x3 - mu) / jnp.sqrt(var + eps) * weight + bias
    return jnp.transpose(y.reshape(B, H, W, C), (0, 3, 1, 2)).astype(x.dtype)


if __name__ == "__main__":
    key = jax.random.PRNGKey(0)
    B, C, H, W = 2, 4, 16, 16

    x = jax.random.normal(key, (B, C, H, W), dtype=jnp.float32)

    # Deterministic parameter init, matching the module's __init__:
    # weight = ones(dim), bias = zeros(dim).
    weight = jnp.ones((C,), dtype=jnp.float32)
    bias = jnp.zeros((C,), dtype=jnp.float32)

    # Default branch of LayerNorm(dim, LayerNorm_type) is WithBias.
    out = layer_norm_pallas(x, weight, bias, layer_norm_type="WithBias")
    out = jax.block_until_ready(out)

    ref = _reference_layer_norm(x, weight, bias, layer_norm_type="WithBias")
    assert out.shape == (B, C, H, W)
    assert jnp.allclose(out, ref, atol=1e-5, rtol=1e-5)

    # Also exercise the BiasFree variant (no bias input / no bias DMA).
    out_bf = layer_norm_pallas(x, weight, layer_norm_type="BiasFree")
    out_bf = jax.block_until_ready(out_bf)
    ref_bf = _reference_layer_norm(x, weight, bias, layer_norm_type="BiasFree")
    assert jnp.allclose(out_bf, ref_bf, atol=1e-5, rtol=1e-5)

    print("KERNEL_OK")
</pallas_src>

<mosaic_0001>
module attributes {stable_mosaic.version = 11 : i64} {
  func.func @_ln_withbias_kernel(%arg0: i32, %arg1: i32, %arg2: memref<1x4x128xf32, #tpu.memory_space<vmem>>, %arg3: memref<4x1xf32, #tpu.memory_space<vmem>>, %arg4: memref<4x1xf32, #tpu.memory_space<vmem>>, %arg5: memref<1x4x128xf32, #tpu.memory_space<vmem>>) attributes {dimension_semantics = [#tpu.dimension_semantics<parallel>, #tpu.dimension_semantics<parallel>], iteration_bounds = array<i64: 2, 2>, scalar_prefetch = 0 : i64, scratch_operands = 0 : i64, tpu.core_type = #tpu.core_type<tc>, window_params = [{transform_indices = @transform_0, window_bounds = array<i64: 1, 4, 128>}, {pipeline_mode = #tpu.pipeline_mode<synchronous>, transform_indices = @transform_1, window_bounds = array<i64: 4, 1>}, {pipeline_mode = #tpu.pipeline_mode<synchronous>, transform_indices = @transform_2, window_bounds = array<i64: 4, 1>}, {transform_indices = @transform_3, window_bounds = array<i64: 1, 4, 128>}]} {
    %c0 = arith.constant 0 : index
    %c0_0 = arith.constant 0 : index
    %c0_1 = arith.constant 0 : index
    %0 = vector.load %arg2[%c0, %c0_0, %c0_1] : memref<1x4x128xf32, #tpu.memory_space<vmem>>, vector<1x4x128xf32>
    %c0_2 = arith.constant 0 : index
    %c0_3 = arith.constant 0 : index
    %1 = vector.load %arg3[%c0_2, %c0_3] : memref<4x1xf32, #tpu.memory_space<vmem>>, vector<4x1xf32>
    %c0_4 = arith.constant 0 : index
    %c0_5 = arith.constant 0 : index
    %2 = vector.load %arg4[%c0_4, %c0_5] : memref<4x1xf32, #tpu.memory_space<vmem>>, vector<4x1xf32>
    %cst = arith.constant dense<0.000000e+00> : vector<1x128xf32>
    %3 = vector.multi_reduction <add>, %0, %cst [1] : vector<1x4x128xf32> to vector<1x128xf32>
    %4 = vector.shape_cast %3 : vector<1x128xf32> to vector<1x1x128xf32>
    %5 = arith.mulf %0, %0 : vector<1x4x128xf32>
    %cst_6 = arith.constant dense<0.000000e+00> : vector<1x128xf32>
    %6 = vector.multi_reduction <add>, %5, %cst_6 [1] : vector<1x4x128xf32> to vector<1x128xf32>
    %7 = vector.shape_cast %6 : vector<1x128xf32> to vector<1x1x128xf32>
    %cst_7 = arith.constant 2.500000e-01 : f32
    %8 = vector.broadcast %cst_7 : f32 to vector<1x1x128xf32>
    %9 = arith.mulf %4, %8 : vector<1x1x128xf32>
    %cst_8 = arith.constant 2.500000e-01 : f32
    %10 = vector.broadcast %cst_8 : f32 to vector<1x1x128xf32>
    %11 = arith.mulf %7, %10 : vector<1x1x128xf32>
    %12 = arith.mulf %9, %9 : vector<1x1x128xf32>
    %13 = arith.subf %11, %12 : vector<1x1x128xf32>
    %cst_9 = arith.constant 0.000000e+00 : f32
    %14 = vector.broadcast %cst_9 : f32 to vector<1x1x128xf32>
    %15 = arith.maximumf %13, %14 : vector<1x1x128xf32>
    %cst_10 = arith.constant 9.99999974E-6 : f32
    %16 = vector.broadcast %cst_10 : f32 to vector<1x1x128xf32>
    %17 = arith.addf %15, %16 : vector<1x1x128xf32>
    %18 = math.rsqrt %17 : vector<1x1x128xf32>
    %19 = vector.broadcast %9 : vector<1x1x128xf32> to vector<1x4x128xf32>
    %20 = arith.subf %0, %19 : vector<1x4x128xf32>
    %21 = vector.broadcast %18 : vector<1x1x128xf32> to vector<1x4x128xf32>
    %22 = arith.mulf %20, %21 : vector<1x4x128xf32>
    %23 = vector.shape_cast %1 : vector<4x1xf32> to vector<1x4x1xf32>
    %24 = vector.broadcast %23 : vector<1x4x1xf32> to vector<1x4x128xf32>
    %25 = arith.mulf %22, %24 : vector<1x4x128xf32>
    %26 = vector.shape_cast %2 : vector<4x1xf32> to vector<1x4x1xf32>
    %27 = vector.broadcast %26 : vector<1x4x1xf32> to vector<1x4x128xf32>
    %28 = arith.addf %25, %27 : vector<1x4x128xf32>
    %c0_11 = arith.constant 0 : index
    %c0_12 = arith.constant 0 : index
    %c0_13 = arith.constant 0 : index
    %29 = vector.load %arg5[%c0_11, %c0_12, %c0_13] : memref<1x4x128xf32, #tpu.memory_space<vmem>>, vector<1x4x128xf32>
    tpu.vector_store %arg5[%c0_11, %c0_12, %c0_13], %28 {strides = array<i32>} : memref<1x4x128xf32, #tpu.memory_space<vmem>>, vector<1x4x128xf32>,
    return
  }
  func.func @transform_0(%arg0: i32, %arg1: i32) -> (i32, i32, i32) {
    %c0_i32 = arith.constant 0 : i32
    %c0_i32_0 = arith.constant 0 : i32
    return %arg0, %c0_i32, %arg1 : i32, i32, i32
  }
  func.func @transform_1(%arg0: i32, %arg1: i32) -> (i32, i32) {
    %c0_i32 = arith.constant 0 : i32
    %c0_i32_0 = arith.constant 0 : i32
    %c0_i32_1 = arith.constant 0 : i32
    return %c0_i32, %c0_i32_0 : i32, i32
  }
  func.func @transform_2(%arg0: i32, %arg1: i32) -> (i32, i32) {
    %c0_i32 = arith.constant 0 : i32
    %c0_i32_0 = arith.constant 0 : i32
    %c0_i32_1 = arith.constant 0 : i32
    return %c0_i32, %c0_i32_0 : i32, i32
  }
  func.func @transform_3(%arg0: i32, %arg1: i32) -> (i32, i32, i32) {
    %c0_i32 = arith.constant 0 : i32
    %c0_i32_0 = arith.constant 0 : i32
    return %arg0, %c0_i32, %arg1 : i32, i32, i32
  }
}

</mosaic_0001>

<llo_original>
// kernel: tpu_custom_call.1
$region0: #{tpu_custom_call.1}
  #allocation0 [shape = 'u32[]', space=smem, size = 0x4, offset = 0x4, fixed_abs, tag = 'smem constant byte address 0x4 - core index']
  #allocation1 [shape = 'u32[144,128]{1,0:T(1,128)}', space=vmem, size = 0x12000, scoped, tag = 'internal scratch']
  %s0 = inlined_call_operand.hbm [shape: f32[2,4,256], index: 0, kind: input, shape index: {}]
  %s1 = inlined_call_operand.vmem [shape: f32[4,1], index: 1, kind: input, shape index: {}]
  %s2 = inlined_call_operand.vmem [shape: f32[4,1], index: 2, kind: input, shape index: {}]
  %s3 = inlined_call_operand.hbm [shape: f32[2,4,256], index: 3, kind: output, shape index: {}]
  %s4 = sld [smem:[#allocation0]]
  $region49: #{tpu_custom_call.1} parent=0
    _
  %s6 = ssub.s32 1, %s4
  %s7 = scalar_select 0, %s6, %s4
  $region1: #{tpu_custom_call.1} parent=0
    #allocation2 [shape = 'u8[4096]{0}', space=vmem, size = 0x1000, scoped, tag = 'input window, operand 0']
    #allocation3 [shape = 's32[2]{0}', space=sflag, size = 0x8, scoped, tag = 'scoped memory for tpu_custom_call.1']
    #allocation4 [shape = 's32[2]{0}', space=sflag, size = 0x8, scoped, tag = 'scoped memory for tpu_custom_call.1']
    #allocation5 [shape = 'u8[4096]{0}', space=vmem, size = 0x1000, scoped, tag = 'output window, operand 0']
    %8 = vsyncpa [#allocation3], 0
    %s9 = scalar_lea.sflag [#allocation3], 1
    %10 = vsyncpa %s9, 0
    %11 = vsyncpa [#allocation4], 0
    %s12 = scalar_lea.sflag [#allocation4], 1
    %13 = vsyncpa %s12, 0
    loop: start=0, step=1, limit=6
    $region2: #{tpu_custom_call.1} parent=1 // loop_pre_header
      _
    $region3: #{tpu_custom_call.1} parent=1 // loop_header
      %s15 = sphi 0, %s19
      %p16 = scmp.ge.s32.totalorder %s15, 6
      %s22 = sphi 0, %s34
      %s23 = sphi 0, %s30
      %s24 = sphi 0, %s22
      %s25 = sphi 0, %s23
      %s26 = sphi 0, %s24
      %s27 = sphi 0, %s25
      %s39 = sphi 0, %s41
      %s42 = sphi 0, %s39
      %s43 = sphi 0, %s42
      %s59 = sphi 0, %s43
      %s63 = sphi 0, %s63
      %s65 = sphi 0, %s63
      %s66 = sphi 0, %s65
      %s80 = sphi 0, %s66
      %s84 = sphi 0, %s84
      %s86 = sphi 0, %s84
      %s87 = sphi 0, %s86
      %s101 = sphi 0, %s87
      %s109 = sphi 0, %s111
      %s112 = sphi 0, %s109
      %s113 = sphi 0, %s112
      %s129 = sphi 0, %s113
    $region4: #{tpu_custom_call.1} parent=1 // loop_header_branch
      %18 = sbr.rel (%p16) target = $region8
    $region5: #{tpu_custom_call.1} parent=1 // loop_body
      %s20 = ssub.s32 %s15, 1
      %s21 = ssub.s32 %s15, 2
      %s28 = sadd.s32 1, %s23
      %p29 = scmp.ge.s32.totalorder %s28, 2
      %s30 = scalar_select %p29, 0, %s28
      %s31 = sadd.s32 1, %s22
      %s32 = scalar_select %p29, %s31, %s22
      %p33 = scmp.ge.s32.totalorder %s32, 2
      %s34 = scalar_select %p33, 0, %s32
      %s35 = ssub.s32 %s22, %s34
      %s36 = ssub.s32 %s23, %s30
      %s37 = sor.u32 %s35, %s36
      %p38 = scmp.eq.s32.totalorder %s37, 0
      %s40 = sadd.s32 %s39, 1
      %s41 = scalar_select %p38, %s39, %s40
      %p44 = pneg %p38
      %p45 = scmp.eq.s32.totalorder %s15, 3
      %p46 = por %p44, %p45
      %p47 = scmp.ne.s32.totalorder %s39, %s42
      %p48 = scmp.eq.s32.totalorder %s15, 0
      %p49 = por %p47, %p48
      %p50 = scmp.ne.s32.totalorder %s39, %s42
      %p51 = scmp.eq.s32.totalorder %s20, 3
      %p52 = por %p50, %p51
      %p53 = scmp.ne.s32.totalorder %s42, %s43
      %p54 = scmp.eq.s32.totalorder %s20, 0
      %p55 = por %p53, %p54
      %p56 = scmp.ne.s32.totalorder %s42, %s43
      %p57 = scmp.eq.s32.totalorder %s21, 3
      %p58 = por %p56, %p57
      %p60 = scmp.ne.s32.totalorder %s43, %s59
      %p61 = scmp.eq.s32.totalorder %s21, 0
      %p62 = por %p60, %p61
      %s64 = sadd.s32 %s63, 1
      %p67 = scmp.eq.s32.totalorder %s15, 3
      %p68 = scmp.ne.s32.totalorder %s63, %s65
      %p69 = scmp.eq.s32.totalorder %s15, 0
      %p70 = por %p68, %p69
      %p71 = scmp.ne.s32.totalorder %s63, %s65
      %p72 = scmp.eq.s32.totalorder %s20, 3
      %p73 = por %p71, %p72
      %p74 = scmp.ne.s32.totalorder %s65, %s66
      %p75 = scmp.eq.s32.totalorder %s20, 0
      %p76 = por %p74, %p75
      %p77 = scmp.ne.s32.totalorder %s65, %s66
      %p78 = scmp.eq.s32.totalorder %s21, 3
      %p79 = por %p77, %p78
      %p81 = scmp.ne.s32.totalorder %s66, %s80
      %p82 = scmp.eq.s32.totalorder %s21, 0
      %p83 = por %p81, %p82
      %s85 = sadd.s32 %s84, 1
      %p88 = scmp.eq.s32.totalorder %s15, 3
      %p89 = scmp.ne.s32.totalorder %s84, %s86
      %p90 = scmp.eq.s32.totalorder %s15, 0
      %p91 = por %p89, %p90
      %p92 = scmp.ne.s32.totalorder %s84, %s86
      %p93 = scmp.eq.s32.totalorder %s20, 3
      %p94 = por %p92, %p93
      %p95 = scmp.ne.s32.totalorder %s86, %s87
      %p96 = scmp.eq.s32.totalorder %s20, 0
      %p97 = por %p95, %p96
      %p98 = scmp.ne.s32.totalorder %s86, %s87
      %p99 = scmp.eq.s32.totalorder %s21, 3
      %p100 = por %p98, %p99
      %p102 = scmp.ne.s32.totalorder %s87, %s101
      %p103 = scmp.eq.s32.totalorder %s21, 0
      %p104 = por %p102, %p103
      %s105 = ssub.s32 %s22, %s34
      %s106 = ssub.s32 %s23, %s30
      %s107 = sor.u32 %s105, %s106
      %p108 = scmp.eq.s32.totalorder %s107, 0
      %s110 = sadd.s32 %s109, 1
      %s111 = scalar_select %p108, %s109, %s110
      %p114 = pneg %p108
      %p115 = scmp.eq.s32.totalorder %s15, 3
      %p116 = por %p114, %p115
      %p117 = scmp.ne.s32.totalorder %s109, %s112
      %p118 = scmp.eq.s32.totalorder %s15, 0
      %p119 = por %p117, %p118
      %p120 = scmp.ne.s32.totalorder %s109, %s112
      %p121 = scmp.eq.s32.totalorder %s20, 3
      %p122 = por %p120, %p121
      %p123 = scmp.ne.s32.totalorder %s112, %s113
      %p124 = scmp.eq.s32.totalorder %s20, 0
      %p125 = por %p123, %p124
      %p126 = scmp.ne.s32.totalorder %s112, %s113
      %p127 = scmp.eq.s32.totalorder %s21, 3
      %p128 = por %p126, %p127
      %p130 = scmp.ne.s32.totalorder %s113, %s129
      %p131 = scmp.eq.s32.totalorder %s21, 0
      %p132 = por %p130, %p131
      %p133 = scmp.le.s32.totalorder 1, %s15
      %p134 = scmp.lt.s32.totalorder %s15, 5
      %p135 = pnand %p133, %p134
      %p136 = pneg %p135
      // Predicated region
      $region9: #{tpu_custom_call.1} parent=5 // pred_check
        _
      $region10: #{tpu_custom_call.1} parent=5 // pred_check_branch
        %138 = sbr.rel (%p135) target = $region12
      $region11: #{tpu_custom_call.1} parent=5 // pred_region
        %s139 = ssub.s32 %s15, 1
        // Predicated region
        $region13: #{tpu_custom_call.1} parent=11 // pred_check
          %p140 = pneg %p76
        $region14: #{tpu_custom_call.1} parent=11 // pred_check_branch
          %142 = sbr.rel (%p140) target = $region16
        $region15: #{tpu_custom_call.1} parent=11 // pred_region
          _
        $region16: #{tpu_custom_call.1} parent=11 // pred_fallthru
          _
        // Predicated region
        $region17: #{tpu_custom_call.1} parent=11 // pred_check
          %p143 = pneg %p97
        $region18: #{tpu_custom_call.1} parent=11 // pred_check_branch
          %145 = sbr.rel (%p143) target = $region20
        $region19: #{tpu_custom_call.1} parent=11 // pred_region
          _
        $region20: #{tpu_custom_call.1} parent=11 // pred_fallthru
          _
      $region12: #{tpu_custom_call.1} parent=5 // pred_fallthru
        _
      %p146 = scmp.lt.s32.totalorder %s15, 4
      // Predicated region
      $region21: #{tpu_custom_call.1} parent=5 // pred_check
        %p147 = pneg %p146
      $region22: #{tpu_custom_call.1} parent=5 // pred_check_branch
        %149 = sbr.rel (%p147) target = $region24
      $region23: #{tpu_custom_call.1} parent=5 // pred_region
        // Predicated region
        $region25: #{tpu_custom_call.1} parent=23 // pred_check
          %p150 = pneg %p49
        $region26: #{tpu_custom_call.1} parent=23 // pred_check_branch
          %152 = sbr.rel (%p150) target = $region28
        $region27: #{tpu_custom_call.1} parent=23 // pred_region
          %s153 = sand.u32 %s39, 1
          %s154 = scalar_lea.sflag [#allocation3], %s153
          %s155 = sand.u32 %s39, 1
          %s156 = smul.addr %s155, 4
          %s157 = scalar_lea.vmem [#allocation2], %s156
          %s159 = ssub.s32 64, 64
          %160 = vsyncadd %s154, %s159
          %s161 = smul.addr %s22, 2
          %s162 = sadd.s32 %s23, %s161
          %s163 = smul.addr %s162, 64
          %s164 = scalar_lea.hbm %s0, %s163
          %s166 = sshll.u32 %s157, 4
          %s167 = int_to_ptr.vmem [resolvable:$true] %s166
          %169 = dma.hbm_to_vmem [thread:$0]  %s164, 64, %s167, %s154
        $region28: #{tpu_custom_call.1} parent=23 // pred_fallthru
          _
      $region24: #{tpu_custom_call.1} parent=5 // pred_fallthru
        _
      %p170 = scmp.le.s32.totalorder 1, %s15
      %p171 = scmp.lt.s32.totalorder %s15, 5
      %p172 = pnand %p170, %p171
      %p173 = pneg %p172
      // Predicated region
      $region29: #{tpu_custom_call.1} parent=5 // pred_check
        _
      $region30: #{tpu_custom_call.1} parent=5 // pred_check_branch
        %175 = sbr.rel (%p172) target = $region32
      $region31: #{tpu_custom_call.1} parent=5 // pred_region
        %s176 = ssub.s32 %s15, 1
        %s177 = sand.u32 %s42, 1
        %s178 = scalar_lea.sflag [#allocation3], %s177
        %s179 = sand.u32 %s42, 1
        %s180 = smul.addr %s179, 4
        %s181 = scalar_lea.vmem [#allocation2], %s180
        // Predicated region
        $region33: #{tpu_custom_call.1} parent=31 // pred_check
          %p182 = pneg %p55
        $region34: #{tpu_custom_call.1} parent=31 // pred_check_branch
          %184 = sbr.rel (%p182) target = $region36
        $region35: #{tpu_custom_call.1} parent=31 // pred_region
          %185 = dma.done %s178, 64
        $region36: #{tpu_custom_call.1} parent=31 // pred_fallthru
          _
        %s186 = sand.u32 %s42, 1
        %s187 = scalar_lea.sflag [#allocation3], %s186
        %s188 = sand.u32 %s42, 1
        %s189 = smul.addr %s188, 4
        %s190 = scalar_lea.vmem [#allocation2], %s189
        %p191 = pneg %p55
        %p192 = pneg %p52
        %p193 = pneg %p76
        %p194 = pneg %p73
        %p195 = pneg %p97
        %p196 = pneg %p94
        %p197 = pneg %p125
        %p198 = pneg %p122
        %s199 = sand.u32 %s112, 1
        %s200 = scalar_lea.sflag [#allocation4], %s199
        %s201 = sand.u32 %s112, 1
        %s202 = smul.addr %s201, 4
        %s203 = scalar_lea.vmem [#allocation5], %s202
        %v204 = vld [vmem:[%s181] sm:$0xf]
        %v205 = vld [vmem:[%s1] sm:$0xf]
        %v206 = vld [vmem:[%s2] sm:$0xf]
        %vm207 = vcmask 1043456
        %v208 = vsel %vm207, %v204, 0.0
        %v209 = vrot.slane %v208, 4
        %v210 = vadd.f32 %v208, %v209
        %v211 = vrot.slane %v210, 2
        %v212 = vadd.f32 %v210, %v211
        %v213 = vrot.slane %v212, 1
        %v214 = vadd.f32 %v212, %v213
        %v215 = vmul.f32 %v204, %v204
        %v216 = vsel %vm207, %v215, 0.0
        %v217 = vrot.slane %v216, 4
        %v218 = vadd.f32 %v216, %v217
        %v219 = vrot.slane %v218, 2
        %v220 = vadd.f32 %v218, %v219
        %v221 = vrot.slane %v220, 1
        %v222 = vadd.f32 %v220, %v221
        %v223 = vmul.f32 %v214, 0.25
        %v224 = vmul.f32 %v222, 0.25
        %v225 = vmul.f32 %v223, %v223
        %v226 = vsub.f32 %v224, %v225
        %v227 = vmax.f32 %v226, 0.0
        %v228 = vadd.f32 %v227, 1e-05
        %v229 = vrsqrt.pop %v228
        %v230 = vsub.f32 %v204, %v223
        %v231 = vmul.f32 %v230, %v229
        %233 = vset.pattern.permute.xlu0 0
        %234 = vperm.xlu0 %233, %v205
        %v235 = vpop.permute.xlu0 %234
        %v237 = vmul.f32 %v231, %v235
        %239 = vset.pattern.permute.xlu0 0
        %240 = vperm.xlu0 %239, %v206
        %v241 = vpop.permute.xlu0 %240
        %v243 = vadd.f32 %v237, %v241
        %244 = vst [vmem:[%s203] sm:$0xf] %v243
        %s245 = sand.u32 %s112, 1
        %s246 = scalar_lea.sflag [#allocation4], %s245
        %s247 = sand.u32 %s112, 1
        %s248 = smul.addr %s247, 4
        %s249 = scalar_lea.vmem [#allocation5], %s248
        // Predicated region
        $region37: #{tpu_custom_call.1} parent=31 // pred_check
          %p250 = pneg %p122
        $region38: #{tpu_custom_call.1} parent=31 // pred_check_branch
          %252 = sbr.rel (%p250) target = $region40
        $region39: #{tpu_custom_call.1} parent=31 // pred_region
          %s254 = ssub.s32 64, 64
          %255 = vsyncadd %s246, %s254
          %s256 = smul.addr %s24, 2
          %s257 = sadd.s32 %s25, %s256
          %s258 = smul.addr %s257, 64
          %s259 = scalar_lea.hbm %s3, %s258
          %s261 = sshll.u32 %s249, 4
          %s262 = int_to_ptr.vmem [resolvable:$true] %s261
          %264 = dma.vmem_to_hbm [thread:$0]  %s262, 64, %s259, %s246
        $region40: #{tpu_custom_call.1} parent=31 // pred_fallthru
          _
      $region32: #{tpu_custom_call.1} parent=5 // pred_fallthru
        _
      %p265 = scmp.le.s32.totalorder 2, %s15
      // Predicated region
      $region41: #{tpu_custom_call.1} parent=5 // pred_check
        %p266 = pneg %p265
      $region42: #{tpu_custom_call.1} parent=5 // pred_check_branch
        %268 = sbr.rel (%p266) target = $region44
      $region43: #{tpu_custom_call.1} parent=5 // pred_region
        %s269 = ssub.s32 %s15, 2
        // Predicated region
        $region45: #{tpu_custom_call.1} parent=43 // pred_check
          %p270 = pneg %p128
        $region46: #{tpu_custom_call.1} parent=43 // pred_check_branch
          %272 = sbr.rel (%p270) target = $region48
        $region47: #{tpu_custom_call.1} parent=43 // pred_region
          %s273 = sand.u32 %s113, 1
          %s274 = scalar_lea.sflag [#allocation4], %s273
          %s275 = sand.u32 %s113, 1
          %s276 = smul.addr %s275, 4
          %s277 = scalar_lea.vmem [#allocation5], %s276
          %278 = dma.done %s274, 64
        $region48: #{tpu_custom_call.1} parent=43 // pred_fallthru
          _
      $region44: #{tpu_custom_call.1} parent=5 // pred_fallthru
        _
    $region6: #{tpu_custom_call.1} parent=1 // loop_footer
      %s19 = sadd.s32 1, %s15
    $region7: #{tpu_custom_call.1} parent=1 // loop_footer_branch
      %14 = sbr.rel target = $region3
    $region8: #{tpu_custom_call.1} parent=1 // loop_exit
      _
    %279 = vsyncpa [#allocation3], 1
    %s280 = scalar_lea.sflag [#allocation3], 1
    %281 = vsyncpa %s280, 1
    %282 = vsyncpa [#allocation4], 1
    %s283 = scalar_lea.sflag [#allocation4], 1
    %284 = vsyncpa %s283, 1

</llo_original>
